<compile_context>
chip_gen: v5e
topology: v5e:2x2
jax: 0.10.0
libtpu: 0.0.40
codegen_flags: <defaults>
</compile_context>

<pallas_src>
import math

import jax
import jax.numpy as jnp
import numpy as np
from jax.experimental import pallas as pl
from jax.experimental.pallas import tpu as pltpu


def _round_up(x, m):
    return ((x + m - 1) // m) * m


def detect_kernel(x_ref, w_ref, b_ref, lin_ref, quad_ref, selx_ref, sely_ref,
                  g_ref, raw_ref, y_ref):
    # 1x1 conv == per-pixel channel matmul on the MXU; pixels are the lane axis.
    v = jnp.dot(w_ref[...], x_ref[...], preferred_element_type=jnp.float32)
    v = v + b_ref[...]                              # (C, T) + (C, 1)
    s = jax.nn.sigmoid(v)                           # EUP
    gxs = g_ref[0:1, :]                             # stride*(col - 0.5), (1, T)
    gys = g_ref[1:2, :]                             # stride*(row - 0.5), (1, T)
    # Folded YOLO decode: xy lanes -> 2*stride*s + stride*(grid-0.5)
    #                     wh lanes -> 4*anchor*s^2
    #                     rest     -> s
    y = (s * lin_ref[...] + (s * s) * quad_ref[...]
         + selx_ref[...] * gxs + sely_ref[...] * gys)
    raw_ref[...] = v.astype(raw_ref.dtype)
    y_ref[...] = y.astype(y_ref.dtype)


def detect_level(x_r, w, bias, lin, quad, selx, sely, g2, *, tile_p):
    """x_r: (bs, ch, npix_pad); w: (C, ch); bias/lin/quad/selx/sely: (C, 1);
    g2: (2, npix_pad). Returns raw, y each (bs, C, npix_pad)."""
    bs, ch, npix_pad = x_r.shape
    C = w.shape[0]
    n_tiles = npix_pad // tile_p
    cvec_spec = pl.BlockSpec((C, 1), lambda b, t: (0, 0))
    raw, y = pl.pallas_call(
        detect_kernel,
        out_shape=(jax.ShapeDtypeStruct((bs, C, npix_pad), jnp.float32),
                   jax.ShapeDtypeStruct((bs, C, npix_pad), jnp.float32)),
        grid=(bs, n_tiles),
        in_specs=[
            pl.BlockSpec((None, ch, tile_p), lambda b, t: (b, 0, t)),  # activations
            pl.BlockSpec((C, ch), lambda b, t: (0, 0)),                # conv weight
            cvec_spec,                                                 # conv bias
            cvec_spec,                                                 # coef_lin
            cvec_spec,                                                 # coef_quad
            cvec_spec,                                                 # sel_x
            cvec_spec,                                                 # sel_y
            pl.BlockSpec((2, tile_p), lambda b, t: (0, t)),            # grid rows
        ],
        out_specs=(pl.BlockSpec((None, C, tile_p), lambda b, t: (b, 0, t)),
                   pl.BlockSpec((None, C, tile_p), lambda b, t: (b, 0, t))),
        compiler_params=pltpu.CompilerParams(
            dimension_semantics=("parallel", "parallel")),
    )(x_r, w, bias, lin, quad, selx, sely, g2)
    return raw, y


class DetectPallas:
    # tile_p_max: pixel tile width (lanes). 512 keeps the double-buffered
    # working set comfortably inside scoped VMEM on v5e/v6e and on v7x's
    # smaller 64 MiB VMEM even at real YOLO sizes (ch=512, C=255).
    def __init__(self, nc, anchors, ch, stride, key, tile_p_max=512):
        self.nc = nc
        self.no = nc + 5
        self.nl = len(anchors)
        self.na = len(anchors[0]) // 2
        self.stride = [float(s) for s in stride]
        self.tile_p_max = int(tile_p_max)
        self.anchors = jnp.asarray(anchors, jnp.float32).reshape(
            self.nl, self.na, 2)
        anchors_np = np.asarray(anchors, np.float32).reshape(
            self.nl, self.na, 2)

        C = self.na * self.no
        o_idx = np.arange(C) % self.no
        a_idx = np.arange(C) // self.no
        mask_xy = (o_idx < 2).astype(np.float32)
        mask_wh = ((o_idx >= 2) & (o_idx < 4)).astype(np.float32)
        # per-channel 0/1 selectors for the x / y grid rows (same at all levels)
        self.sel_x = jnp.asarray((o_idx == 0).astype(np.float32)[:, None])
        self.sel_y = jnp.asarray((o_idx == 1).astype(np.float32)[:, None])

        self.weights, self.biases = [], []
        self.coef_lin, self.coef_quad = [], []
        # deterministic Conv2d(ch_i, no*na, 1) init (kaiming-uniform-ish bounds)
        for i, c in enumerate(ch):
            kw, kb = jax.random.split(jax.random.fold_in(key, i))
            bound = 1.0 / math.sqrt(c)
            w = jax.random.uniform(kw, (C, c), jnp.float32, -bound, bound)
            bvec = jax.random.uniform(kb, (C,), jnp.float32, -bound, bound)
            self.weights.append(w)
            self.biases.append(bvec)
            s_i = self.stride[i]
            anchor_vals = anchors_np[i][a_idx, np.clip(o_idx - 2, 0, 1)]
            lin = mask_xy * (2.0 * s_i) + (1.0 - mask_xy - mask_wh)
            quad = mask_wh * 4.0 * anchor_vals
            self.coef_lin.append(jnp.asarray(lin[:, None], jnp.float32))
            self.coef_quad.append(jnp.asarray(quad[:, None], jnp.float32))

    def _grid_rows(self, i, nx, npix_pad):
        # Per-pixel [stride*(col-0.5), stride*(row-0.5)] rows; pixels are
        # (row, col) row-major within one batch image. Padded pixels hold
        # garbage that gets sliced off in __call__.
        s = self.stride[i]
        p = np.arange(npix_pad)
        gxs = s * ((p % nx).astype(np.float32) - 0.5)
        gys = s * ((p // nx).astype(np.float32) - 0.5)
        return jnp.asarray(np.stack([gxs, gys], axis=0), jnp.float32)

    def __call__(self, xs):
        z, outs = [], []
        for i in range(self.nl):
            x = xs[i]
            bs, ch, ny, nx = x.shape
            npix = ny * nx
            tile_p = min(self.tile_p_max, _round_up(npix, 128))
            npix_pad = _round_up(npix, tile_p)
            x_r = x.reshape(bs, ch, npix)          # NCHW -> (bs, ch, pix): free
            if npix_pad != npix:
                x_r = jnp.pad(x_r, ((0, 0), (0, 0), (0, npix_pad - npix)))
            g2 = self._grid_rows(i, nx, npix_pad)
            raw, y = detect_level(
                x_r, self.weights[i], self.biases[i][:, None],
                self.coef_lin[i], self.coef_quad[i],
                self.sel_x, self.sel_y, g2, tile_p=tile_p)
            raw = raw[:, :, :npix]
            y = y[:, :, :npix]
            # back to torch's (bs, na, ny, nx, no)
            raw5 = raw.reshape(bs, self.na, self.no, ny, nx).transpose(
                0, 1, 3, 4, 2)
            y5 = y.reshape(bs, self.na, self.no, ny, nx).transpose(
                0, 1, 3, 4, 2)
            outs.append(raw5)
            z.append(y5.reshape(bs, -1, self.no))
        return jnp.concatenate(z, axis=1), outs


def reference_forward(xs, det):
    """Pure-JAX reference mirroring the torch forward exactly."""
    z, outs = [], []
    for i in range(det.nl):
        x = xs[i]
        bs, ch, ny, nx = x.shape
        v = jnp.einsum("bchw,oc->bohw", x, det.weights[i]) \
            + det.biases[i][None, :, None, None]
        v5 = v.reshape(bs, det.na, det.no, ny, nx).transpose(0, 1, 3, 4, 2)
        gy, gx = jnp.meshgrid(jnp.arange(ny), jnp.arange(nx), indexing="ij")
        grid = jnp.stack([gx, gy], -1).reshape(1, 1, ny, nx, 2).astype(
            jnp.float32)
        s = jax.nn.sigmoid(v5)
        xy = (s[..., 0:2] * 2.0 - 0.5 + grid) * det.stride[i]
        ag = det.anchors[i].reshape(1, det.na, 1, 1, 2)
        wh = (s[..., 2:4] * 2.0) ** 2 * ag
        y = jnp.concatenate([xy, wh, s[..., 4:]], axis=-1)
        outs.append(v5)
        z.append(y.reshape(bs, -1, det.no))
    return jnp.concatenate(z, 1), outs


if __name__ == "__main__":
    key = jax.random.PRNGKey(0)
    nc = 3                                  # small class count -> no = 8
    anchors = ((10, 13, 16, 30, 33, 23),
               (30, 61, 62, 45, 59, 119))   # nl = 2, na = 3
    ch = (8, 16)
    strides = (8.0, 16.0)
    bs = 2

    det = DetectPallas(nc, anchors, ch, strides, jax.random.fold_in(key, 100))

    k0, k1 = jax.random.split(key)
    x0 = jax.random.normal(k0, (bs, ch[0], 8, 8), jnp.float32)
    x1 = jax.random.normal(k1, (bs, ch[1], 4, 4), jnp.float32)
    xs = [x0, x1]

    z, outs = det(xs)
    z = jax.block_until_ready(z)
    outs = [jax.block_until_ready(o) for o in outs]

    z_ref, outs_ref = reference_forward(xs, det)
    np.testing.assert_allclose(np.asarray(z), np.asarray(z_ref),
                               rtol=1e-5, atol=1e-5)
    for o, o_ref in zip(outs, outs_ref):
        np.testing.assert_allclose(np.asarray(o), np.asarray(o_ref),
                                   rtol=1e-5, atol=1e-5)

    print("KERNEL_OK")
</pallas_src>

<mosaic_0001>
module attributes {stable_mosaic.version = 11 : i64} {
  func.func @detect_kernel(%arg0: i32, %arg1: i32, %arg2: memref<1x8x128xf32, #tpu.memory_space<vmem>>, %arg3: memref<24x8xf32, #tpu.memory_space<vmem>>, %arg4: memref<24x1xf32, #tpu.memory_space<vmem>>, %arg5: memref<24x1xf32, #tpu.memory_space<vmem>>, %arg6: memref<24x1xf32, #tpu.memory_space<vmem>>, %arg7: memref<24x1xf32, #tpu.memory_space<vmem>>, %arg8: memref<24x1xf32, #tpu.memory_space<vmem>>, %arg9: memref<2x128xf32, #tpu.memory_space<vmem>>, %arg10: memref<1x24x128xf32, #tpu.memory_space<vmem>>, %arg11: memref<1x24x128xf32, #tpu.memory_space<vmem>>) attributes {dimension_semantics = [#tpu.dimension_semantics<parallel>, #tpu.dimension_semantics<parallel>], iteration_bounds = array<i64: 2, 1>, scalar_prefetch = 0 : i64, scratch_operands = 0 : i64, tpu.core_type = #tpu.core_type<tc>, window_params = [{transform_indices = @transform_0, window_bounds = array<i64: 1, 8, 128>}, {pipeline_mode = #tpu.pipeline_mode<synchronous>, transform_indices = @transform_1, window_bounds = array<i64: 24, 8>}, {pipeline_mode = #tpu.pipeline_mode<synchronous>, transform_indices = @transform_2, window_bounds = array<i64: 24, 1>}, {pipeline_mode = #tpu.pipeline_mode<synchronous>, transform_indices = @transform_3, window_bounds = array<i64: 24, 1>}, {pipeline_mode = #tpu.pipeline_mode<synchronous>, transform_indices = @transform_4, window_bounds = array<i64: 24, 1>}, {pipeline_mode = #tpu.pipeline_mode<synchronous>, transform_indices = @transform_5, window_bounds = array<i64: 24, 1>}, {pipeline_mode = #tpu.pipeline_mode<synchronous>, transform_indices = @transform_6, window_bounds = array<i64: 24, 1>}, {transform_indices = @transform_7, window_bounds = array<i64: 2, 128>}, {transform_indices = @transform_8, window_bounds = array<i64: 1, 24, 128>}, {transform_indices = @transform_9, window_bounds = array<i64: 1, 24, 128>}]} {
    %c0 = arith.constant 0 : index
    %c0_0 = arith.constant 0 : index
    %0 = vector.load %arg3[%c0, %c0_0] : memref<24x8xf32, #tpu.memory_space<vmem>>, vector<24x8xf32>
    %c0_1 = arith.constant 0 : index
    %c0_2 = arith.constant 0 : index
    %c0_3 = arith.constant 0 : index
    %1 = vector.load %arg2[%c0_1, %c0_2, %c0_3] : memref<1x8x128xf32, #tpu.memory_space<vmem>>, vector<1x8x128xf32>
    %2 = vector.shape_cast %1 : vector<1x8x128xf32> to vector<8x128xf32>
    %cst = arith.constant dense<0.000000e+00> : vector<24x128xf32>
    %3 = tpu.matmul %0, %2, %cst {dimension_numbers = #tpu.dot_dimension_numbers<[1], [0], [0], [1], [0, 0, 1, 1], [], []>} : vector<24x8xf32>, vector<8x128xf32>, vector<24x128xf32> -> vector<24x128xf32>
    %c0_4 = arith.constant 0 : index
    %c0_5 = arith.constant 0 : index
    %4 = vector.load %arg4[%c0_4, %c0_5] : memref<24x1xf32, #tpu.memory_space<vmem>>, vector<24x1xf32>
    %5 = vector.broadcast %4 : vector<24x1xf32> to vector<24x128xf32>
    %6 = arith.addf %3, %5 : vector<24x128xf32>
    %7 = arith.negf %6 : vector<24x128xf32>
    %8 = math.exp %7 : vector<24x128xf32>
    %cst_6 = arith.constant 1.000000e+00 : f32
    %9 = vector.broadcast %cst_6 : f32 to vector<24x128xf32>
    %10 = arith.addf %9, %8 : vector<24x128xf32>
    %11 = arith.divf %9, %10 : vector<24x128xf32>
    %c0_7 = arith.constant 0 : index
    %c0_8 = arith.constant 0 : index
    %12 = vector.load %arg9[%c0_7, %c0_8] : memref<2x128xf32, #tpu.memory_space<vmem>>, vector<1x128xf32>
    %c1 = arith.constant 1 : index
    %c0_9 = arith.constant 0 : index
    %13 = vector.load %arg9[%c1, %c0_9] : memref<2x128xf32, #tpu.memory_space<vmem>>, vector<1x128xf32>
    %c0_10 = arith.constant 0 : index
    %c0_11 = arith.constant 0 : index
    %14 = vector.load %arg5[%c0_10, %c0_11] : memref<24x1xf32, #tpu.memory_space<vmem>>, vector<24x1xf32>
    %15 = vector.broadcast %14 : vector<24x1xf32> to vector<24x128xf32>
    %16 = arith.mulf %11, %15 : vector<24x128xf32>
    %17 = arith.mulf %11, %11 : vector<24x128xf32>
    %c0_12 = arith.constant 0 : index
    %c0_13 = arith.constant 0 : index
    %18 = vector.load %arg6[%c0_12, %c0_13] : memref<24x1xf32, #tpu.memory_space<vmem>>, vector<24x1xf32>
    %19 = vector.broadcast %18 : vector<24x1xf32> to vector<24x128xf32>
    %20 = arith.mulf %17, %19 : vector<24x128xf32>
    %21 = arith.addf %16, %20 : vector<24x128xf32>
    %c0_14 = arith.constant 0 : index
    %c0_15 = arith.constant 0 : index
    %22 = vector.load %arg7[%c0_14, %c0_15] : memref<24x1xf32, #tpu.memory_space<vmem>>, vector<24x1xf32>
    %23 = vector.broadcast %22 : vector<24x1xf32> to vector<24x128xf32>
    %24 = vector.broadcast %12 : vector<1x128xf32> to vector<24x128xf32>
    %25 = arith.mulf %23, %24 : vector<24x128xf32>
    %26 = arith.addf %21, %25 : vector<24x128xf32>
    %c0_16 = arith.constant 0 : index
    %c0_17 = arith.constant 0 : index
    %27 = vector.load %arg8[%c0_16, %c0_17] : memref<24x1xf32, #tpu.memory_space<vmem>>, vector<24x1xf32>
    %28 = vector.broadcast %27 : vector<24x1xf32> to vector<24x128xf32>
    %29 = vector.broadcast %13 : vector<1x128xf32> to vector<24x128xf32>
    %30 = arith.mulf %28, %29 : vector<24x128xf32>
    %31 = arith.addf %26, %30 : vector<24x128xf32>
    %c0_18 = arith.constant 0 : index
    %c0_19 = arith.constant 0 : index
    %c0_20 = arith.constant 0 : index
    %32 = vector.load %arg10[%c0_18, %c0_19, %c0_20] : memref<1x24x128xf32, #tpu.memory_space<vmem>>, vector<1x24x128xf32>
    %33 = vector.shape_cast %32 : vector<1x24x128xf32> to vector<24x128xf32>
    %34 = vector.shape_cast %6 : vector<24x128xf32> to vector<1x24x128xf32>
    tpu.vector_store %arg10[%c0_18, %c0_19, %c0_20], %34 {strides = array<i32>} : memref<1x24x128xf32, #tpu.memory_space<vmem>>, vector<1x24x128xf32>,
    %c0_21 = arith.constant 0 : index
    %c0_22 = arith.constant 0 : index
    %c0_23 = arith.constant 0 : index
    %35 = vector.load %arg11[%c0_21, %c0_22, %c0_23] : memref<1x24x128xf32, #tpu.memory_space<vmem>>, vector<1x24x128xf32>
    %36 = vector.shape_cast %35 : vector<1x24x128xf32> to vector<24x128xf32>
    %37 = vector.shape_cast %31 : vector<24x128xf32> to vector<1x24x128xf32>
    tpu.vector_store %arg11[%c0_21, %c0_22, %c0_23], %37 {strides = array<i32>} : memref<1x24x128xf32, #tpu.memory_space<vmem>>, vector<1x24x128xf32>,
    return
  }
  func.func @transform_0(%arg0: i32, %arg1: i32) -> (i32, i32, i32) {
    %c0_i32 = arith.constant 0 : i32
    %c0_i32_0 = arith.constant 0 : i32
    return %arg0, %c0_i32, %arg1 : i32, i32, i32
  }
  func.func @transform_1(%arg0: i32, %arg1: i32) -> (i32, i32) {
    %c0_i32 = arith.constant 0 : i32
    %c0_i32_0 = arith.constant 0 : i32
    %c0_i32_1 = arith.constant 0 : i32
    return %c0_i32, %c0_i32_0 : i32, i32
  }
  func.func @transform_2(%arg0: i32, %arg1: i32) -> (i32, i32) {
    %c0_i32 = arith.constant 0 : i32
    %c0_i32_0 = arith.constant 0 : i32
    %c0_i32_1 = arith.constant 0 : i32
    return %c0_i32, %c0_i32_0 : i32, i32
  }
  func.func @transform_3(%arg0: i32, %arg1: i32) -> (i32, i32) {
    %c0_i32 = arith.constant 0 : i32
    %c0_i32_0 = arith.constant 0 : i32
    %c0_i32_1 = arith.constant 0 : i32
    return %c0_i32, %c0_i32_0 : i32, i32
  }
  func.func @transform_4(%arg0: i32, %arg1: i32) -> (i32, i32) {
    %c0_i32 = arith.constant 0 : i32
    %c0_i32_0 = arith.constant 0 : i32
    %c0_i32_1 = arith.constant 0 : i32
    return %c0_i32, %c0_i32_0 : i32, i32
  }
  func.func @transform_5(%arg0: i32, %arg1: i32) -> (i32, i32) {
    %c0_i32 = arith.constant 0 : i32
    %c0_i32_0 = arith.constant 0 : i32
    %c0_i32_1 = arith.constant 0 : i32
    return %c0_i32, %c0_i32_0 : i32, i32
  }
  func.func @transform_6(%arg0: i32, %arg1: i32) -> (i32, i32) {
    %c0_i32 = arith.constant 0 : i32
    %c0_i32_0 = arith.constant 0 : i32
    %c0_i32_1 = arith.constant 0 : i32
    return %c0_i32, %c0_i32_0 : i32, i32
  }
  func.func @transform_7(%arg0: i32, %arg1: i32) -> (i32, i32) {
    %c0_i32 = arith.constant 0 : i32
    %c0_i32_0 = arith.constant 0 : i32
    return %c0_i32, %arg1 : i32, i32
  }
  func.func @transform_8(%arg0: i32, %arg1: i32) -> (i32, i32, i32) {
    %c0_i32 = arith.constant 0 : i32
    %c0_i32_0 = arith.constant 0 : i32
    return %arg0, %c0_i32, %arg1 : i32, i32, i32
  }
  func.func @transform_9(%arg0: i32, %arg1: i32) -> (i32, i32, i32) {
    %c0_i32 = arith.constant 0 : i32
    %c0_i32_0 = arith.constant 0 : i32
    return %arg0, %c0_i32, %arg1 : i32, i32, i32
  }
}

</mosaic_0001>

<llo_original>
// kernel: tpu_custom_call.1
$region0: #{tpu_custom_call.1}
  #allocation0 [shape = 'u32[]', space=smem, size = 0x4, offset = 0x4, fixed_abs, tag = 'smem constant byte address 0x4 - core index']
  #allocation1 [shape = 'u32[72,128]{1,0:T(1,128)}', space=vmem, size = 0x9000, scoped, tag = 'internal scratch']
  %s0 = inlined_call_operand.vmem [shape: f32[2,8,128], index: 0, kind: input, shape index: {}]
  %s1 = inlined_call_operand.vmem [shape: f32[24,8], index: 1, kind: input, shape index: {}]
  %s2 = inlined_call_operand.vmem [shape: f32[24,1], index: 2, kind: input, shape index: {}]
  %s3 = inlined_call_operand.vmem [shape: f32[24,1], index: 3, kind: input, shape index: {}]
  %s4 = inlined_call_operand.vmem [shape: f32[24,1], index: 4, kind: input, shape index: {}]
  %s5 = inlined_call_operand.vmem [shape: f32[24,1], index: 5, kind: input, shape index: {}]
  %s6 = inlined_call_operand.vmem [shape: f32[24,1], index: 6, kind: input, shape index: {}]
  %s7 = inlined_call_operand.vmem [shape: f32[2,128], index: 7, kind: input, shape index: {}]
  %s8 = inlined_call_operand.hbm [shape: f32[2,24,128], index: 8, kind: output, shape index: {0}]
  %s9 = inlined_call_operand.hbm [shape: f32[2,24,128], index: 9, kind: output, shape index: {1}]
  %10 = xla_tuple %s8, %s9
  %s11 = sld [smem:[#allocation0]]
  $region73: #{tpu_custom_call.1} parent=0
    _
  %s13 = ssub.s32 1, %s11
  %s14 = scalar_select 0, %s13, %s11
  $region1: #{tpu_custom_call.1} parent=0
    #allocation2 [shape = 'u8[24576]{0}', space=vmem, size = 0x6000, scoped, tag = 'output window, operand 0']
    #allocation3 [shape = 's32[2]{0}', space=sflag, size = 0x8, scoped, tag = 'scoped memory for tpu_custom_call.1']
    #allocation4 [shape = 'u8[24576]{0}', space=vmem, size = 0x6000, scoped, tag = 'output window, operand 1']
    #allocation5 [shape = 's32[2]{0}', space=sflag, size = 0x8, scoped, tag = 'scoped memory for tpu_custom_call.1']
    %15 = vsyncpa [#allocation3], 0
    %s16 = scalar_lea.sflag [#allocation3], 1
    %17 = vsyncpa %s16, 0
    %18 = vsyncpa [#allocation5], 0
    %s19 = scalar_lea.sflag [#allocation5], 1
    %20 = vsyncpa %s19, 0
    loop: start=0, step=1, limit=4
    $region2: #{tpu_custom_call.1} parent=1 // loop_pre_header
      _
    $region3: #{tpu_custom_call.1} parent=1 // loop_header
      %s22 = sphi 0, %s26
      %p23 = scmp.ge.s32.totalorder %s22, 4
      %s29 = sphi 0, %s41
      %s30 = sphi 0, %s37
      %s31 = sphi 0, %s29
      %s32 = sphi 0, %s30
      %s33 = sphi 0, %s31
      %s34 = sphi 0, %s32
      %s46 = sphi 0, %s48
      %s49 = sphi 0, %s46
      %s50 = sphi 0, %s49
      %s66 = sphi 0, %s50
      %s70 = sphi 0, %s70
      %s72 = sphi 0, %s70
      %s73 = sphi 0, %s72
      %s87 = sphi 0, %s73
      %s91 = sphi 0, %s91
      %s93 = sphi 0, %s91
      %s94 = sphi 0, %s93
      %s108 = sphi 0, %s94
      %s112 = sphi 0, %s112
      %s114 = sphi 0, %s112
      %s115 = sphi 0, %s114
      %s129 = sphi 0, %s115
      %s133 = sphi 0, %s133
      %s135 = sphi 0, %s133
      %s136 = sphi 0, %s135
      %s150 = sphi 0, %s136
      %s154 = sphi 0, %s154
      %s156 = sphi 0, %s154
      %s157 = sphi 0, %s156
      %s171 = sphi 0, %s157
      %s175 = sphi 0, %s175
      %s177 = sphi 0, %s175
      %s178 = sphi 0, %s177
      %s192 = sphi 0, %s178
      %s198 = sphi 0, %s200
      %s201 = sphi 0, %s198
      %s202 = sphi 0, %s201
      %s218 = sphi 0, %s202
      %s226 = sphi 0, %s228
      %s229 = sphi 0, %s226
      %s230 = sphi 0, %s229
      %s246 = sphi 0, %s230
      %s254 = sphi 0, %s256
      %s257 = sphi 0, %s254
      %s258 = sphi 0, %s257
      %s274 = sphi 0, %s258
    $region4: #{tpu_custom_call.1} parent=1 // loop_header_branch
      %25 = sbr.rel (%p23) target = $region8
    $region5: #{tpu_custom_call.1} parent=1 // loop_body
      %s27 = ssub.s32 %s22, 1
      %s28 = ssub.s32 %s22, 2
      %s35 = sadd.s32 1, %s30
      %p36 = scmp.ge.s32.totalorder %s35, 1
      %s37 = scalar_select %p36, 0, %s35
      %s38 = sadd.s32 1, %s29
      %s39 = scalar_select %p36, %s38, %s29
      %p40 = scmp.ge.s32.totalorder %s39, 2
      %s41 = scalar_select %p40, 0, %s39
      %s42 = ssub.s32 %s29, %s41
      %s43 = ssub.s32 %s30, %s37
      %s44 = sor.u32 %s42, %s43
      %p45 = scmp.eq.s32.totalorder %s44, 0
      %s47 = sadd.s32 %s46, 1
      %s48 = scalar_select %p45, %s46, %s47
      %p51 = pneg %p45
      %p52 = scmp.eq.s32.totalorder %s22, 1
      %p53 = por %p51, %p52
      %p54 = scmp.ne.s32.totalorder %s46, %s49
      %p55 = scmp.eq.s32.totalorder %s22, 0
      %p56 = por %p54, %p55
      %p57 = scmp.ne.s32.totalorder %s46, %s49
      %p58 = scmp.eq.s32.totalorder %s27, 1
      %p59 = por %p57, %p58
      %p60 = scmp.ne.s32.totalorder %s49, %s50
      %p61 = scmp.eq.s32.totalorder %s27, 0
      %p62 = por %p60, %p61
      %p63 = scmp.ne.s32.totalorder %s49, %s50
      %p64 = scmp.eq.s32.totalorder %s28, 1
      %p65 = por %p63, %p64
      %p67 = scmp.ne.s32.totalorder %s50, %s66
      %p68 = scmp.eq.s32.totalorder %s28, 0
      %p69 = por %p67, %p68
      %s71 = sadd.s32 %s70, 1
      %p74 = scmp.eq.s32.totalorder %s22, 1
      %p75 = scmp.ne.s32.totalorder %s70, %s72
      %p76 = scmp.eq.s32.totalorder %s22, 0
      %p77 = por %p75, %p76
      %p78 = scmp.ne.s32.totalorder %s70, %s72
      %p79 = scmp.eq.s32.totalorder %s27, 1
      %p80 = por %p78, %p79
      %p81 = scmp.ne.s32.totalorder %s72, %s73
      %p82 = scmp.eq.s32.totalorder %s27, 0
      %p83 = por %p81, %p82
      %p84 = scmp.ne.s32.totalorder %s72, %s73
      %p85 = scmp.eq.s32.totalorder %s28, 1
      %p86 = por %p84, %p85
      %p88 = scmp.ne.s32.totalorder %s73, %s87
      %p89 = scmp.eq.s32.totalorder %s28, 0
      %p90 = por %p88, %p89
      %s92 = sadd.s32 %s91, 1
      %p95 = scmp.eq.s32.totalorder %s22, 1
      %p96 = scmp.ne.s32.totalorder %s91, %s93
      %p97 = scmp.eq.s32.totalorder %s22, 0
      %p98 = por %p96, %p97
      %p99 = scmp.ne.s32.totalorder %s91, %s93
      %p100 = scmp.eq.s32.totalorder %s27, 1
      %p101 = por %p99, %p100
      %p102 = scmp.ne.s32.totalorder %s93, %s94
      %p103 = scmp.eq.s32.totalorder %s27, 0
      %p104 = por %p102, %p103
      %p105 = scmp.ne.s32.totalorder %s93, %s94
      %p106 = scmp.eq.s32.totalorder %s28, 1
      %p107 = por %p105, %p106
      %p109 = scmp.ne.s32.totalorder %s94, %s108
      %p110 = scmp.eq.s32.totalorder %s28, 0
      %p111 = por %p109, %p110
      %s113 = sadd.s32 %s112, 1
      %p116 = scmp.eq.s32.totalorder %s22, 1
      %p117 = scmp.ne.s32.totalorder %s112, %s114
      %p118 = scmp.eq.s32.totalorder %s22, 0
      %p119 = por %p117, %p118
      %p120 = scmp.ne.s32.totalorder %s112, %s114
      %p121 = scmp.eq.s32.totalorder %s27, 1
      %p122 = por %p120, %p121
      %p123 = scmp.ne.s32.totalorder %s114, %s115
      %p124 = scmp.eq.s32.totalorder %s27, 0
      %p125 = por %p123, %p124
      %p126 = scmp.ne.s32.totalorder %s114, %s115
      %p127 = scmp.eq.s32.totalorder %s28, 1
      %p128 = por %p126, %p127
      %p130 = scmp.ne.s32.totalorder %s115, %s129
      %p131 = scmp.eq.s32.totalorder %s28, 0
      %p132 = por %p130, %p131
      %s134 = sadd.s32 %s133, 1
      %p137 = scmp.eq.s32.totalorder %s22, 1
      %p138 = scmp.ne.s32.totalorder %s133, %s135
      %p139 = scmp.eq.s32.totalorder %s22, 0
      %p140 = por %p138, %p139
      %p141 = scmp.ne.s32.totalorder %s133, %s135
      %p142 = scmp.eq.s32.totalorder %s27, 1
      %p143 = por %p141, %p142
      %p144 = scmp.ne.s32.totalorder %s135, %s136
      %p145 = scmp.eq.s32.totalorder %s27, 0
      %p146 = por %p144, %p145
      %p147 = scmp.ne.s32.totalorder %s135, %s136
      %p148 = scmp.eq.s32.totalorder %s28, 1
      %p149 = por %p147, %p148
      %p151 = scmp.ne.s32.totalorder %s136, %s150
      %p152 = scmp.eq.s32.totalorder %s28, 0
      %p153 = por %p151, %p152
      %s155 = sadd.s32 %s154, 1
      %p158 = scmp.eq.s32.totalorder %s22, 1
      %p159 = scmp.ne.s32.totalorder %s154, %s156
      %p160 = scmp.eq.s32.totalorder %s22, 0
      %p161 = por %p159, %p160
      %p162 = scmp.ne.s32.totalorder %s154, %s156
      %p163 = scmp.eq.s32.totalorder %s27, 1
      %p164 = por %p162, %p163
      %p165 = scmp.ne.s32.totalorder %s156, %s157
      %p166 = scmp.eq.s32.totalorder %s27, 0
      %p167 = por %p165, %p166
      %p168 = scmp.ne.s32.totalorder %s156, %s157
      %p169 = scmp.eq.s32.totalorder %s28, 1
      %p170 = por %p168, %p169
      %p172 = scmp.ne.s32.totalorder %s157, %s171
      %p173 = scmp.eq.s32.totalorder %s28, 0
      %p174 = por %p172, %p173
      %s176 = sadd.s32 %s175, 1
      %p179 = scmp.eq.s32.totalorder %s22, 1
      %p180 = scmp.ne.s32.totalorder %s175, %s177
      %p181 = scmp.eq.s32.totalorder %s22, 0
      %p182 = por %p180, %p181
      %p183 = scmp.ne.s32.totalorder %s175, %s177
      %p184 = scmp.eq.s32.totalorder %s27, 1
      %p185 = por %p183, %p184
      %p186 = scmp.ne.s32.totalorder %s177, %s178
      %p187 = scmp.eq.s32.totalorder %s27, 0
      %p188 = por %p186, %p187
      %p189 = scmp.ne.s32.totalorder %s177, %s178
      %p190 = scmp.eq.s32.totalorder %s28, 1
      %p191 = por %p189, %p190
      %p193 = scmp.ne.s32.totalorder %s178, %s192
      %p194 = scmp.eq.s32.totalorder %s28, 0
      %p195 = por %p193, %p194
      %s196 = ssub.s32 %s30, %s37
      %p197 = scmp.eq.s32.totalorder %s196, 0
      %s199 = sadd.s32 %s198, 1
      %s200 = scalar_select %p197, %s198, %s199
      %p203 = pneg %p197
      %p204 = scmp.eq.s32.totalorder %s22, 1
      %p205 = por %p203, %p204
      %p206 = scmp.ne.s32.totalorder %s198, %s201
      %p207 = scmp.eq.s32.totalorder %s22, 0
      %p208 = por %p206, %p207
      %p209 = scmp.ne.s32.totalorder %s198, %s201
      %p210 = scmp.eq.s32.totalorder %s27, 1
      %p211 = por %p209, %p210
      %p212 = scmp.ne.s32.totalorder %s201, %s202
      %p213 = scmp.eq.s32.totalorder %s27, 0
      %p214 = por %p212, %p213
      %p215 = scmp.ne.s32.totalorder %s201, %s202
      %p216 = scmp.eq.s32.totalorder %s28, 1
      %p217 = por %p215, %p216
      %p219 = scmp.ne.s32.totalorder %s202, %s218
      %p220 = scmp.eq.s32.totalorder %s28, 0
      %p221 = por %p219, %p220
      %s222 = ssub.s32 %s29, %s41
      %s223 = ssub.s32 %s30, %s37
      %s224 = sor.u32 %s222, %s223
      %p225 = scmp.eq.s32.totalorder %s224, 0
      %s227 = sadd.s32 %s226, 1
      %s228 = scalar_select %p225, %s226, %s227
      %p231 = pneg %p225
      %p232 = scmp.eq.s32.totalorder %s22, 1
      %p233 = por %p231, %p232
      %p234 = scmp.ne.s32.totalorder %s226, %s229
      %p235 = scmp.eq.s32.totalorder %s22, 0
      %p236 = por %p234, %p235
      %p237 = scmp.ne.s32.totalorder %s226, %s229
      %p238 = scmp.eq.s32.totalorder %s27, 1
      %p239 = por %p237, %p238
      %p240 = scmp.ne.s32.totalorder %s229, %s230
      %p241 = scmp.eq.s32.totalorder %s27, 0
      %p242 = por %p240, %p241
      %p243 = scmp.ne.s32.totalorder %s229, %s230
      %p244 = scmp.eq.s32.totalorder %s28, 1
      %p245 = por %p243, %p244
      %p247 = scmp.ne.s32.totalorder %s230, %s246
      %p248 = scmp.eq.s32.totalorder %s28, 0
      %p249 = por %p247, %p248
      %s250 = ssub.s32 %s29, %s41
      %s251 = ssub.s32 %s30, %s37
      %s252 = sor.u32 %s250, %s251
      %p253 = scmp.eq.s32.totalorder %s252, 0
      %s255 = sadd.s32 %s254, 1
      %s256 = scalar_select %p253, %s254, %s255
      %p259 = pneg %p253
      %p260 = scmp.eq.s32.totalorder %s22, 1
      %p261 = por %p259, %p260
      %p262 = scmp.ne.s32.totalorder %s254, %s257
      %p263 = scmp.eq.s32.totalorder %s22, 0
      %p264 = por %p262, %p263
      %p265 = scmp.ne.s32.totalorder %s254, %s257
      %p266 = scmp.eq.s32.totalorder %s27, 1
      %p267 = por %p265, %p266
      %p268 = scmp.ne.s32.totalorder %s257, %s258
      %p269 = scmp.eq.s32.totalorder %s27, 0
      %p270 = por %p268, %p269
      %p271 = scmp.ne.s32.totalorder %s257, %s258
      %p272 = scmp.eq.s32.totalorder %s28, 1
      %p273 = por %p271, %p272
      %p275 = scmp.ne.s32.totalorder %s258, %s274
      %p276 = scmp.eq.s32.totalorder %s28, 0
      %p277 = por %p275, %p276
      %p278 = scmp.le.s32.totalorder 1, %s22
      %p279 = scmp.lt.s32.totalorder %s22, 3
      %p280 = pnand %p278, %p279
      %p281 = pneg %p280
      // Predicated region
      $region9: #{tpu_custom_call.1} parent=5 // pred_check
        _
      $region10: #{tpu_custom_call.1} parent=5 // pred_check_branch
        %283 = sbr.rel (%p280) target = $region12
      $region11: #{tpu_custom_call.1} parent=5 // pred_region
        %s284 = ssub.s32 %s22, 1
        // Predicated region
        $region13: #{tpu_custom_call.1} parent=11 // pred_check
          %p285 = pneg %p83
        $region14: #{tpu_custom_call.1} parent=11 // pred_check_branch
          %287 = sbr.rel (%p285) target = $region16
        $region15: #{tpu_custom_call.1} parent=11 // pred_region
          _
        $region16: #{tpu_custom_call.1} parent=11 // pred_fallthru
          _
        // Predicated region
        $region17: #{tpu_custom_call.1} parent=11 // pred_check
          %p288 = pneg %p104
        $region18: #{tpu_custom_call.1} parent=11 // pred_check_branch
          %290 = sbr.rel (%p288) target = $region20
        $region19: #{tpu_custom_call.1} parent=11 // pred_region
          _
        $region20: #{tpu_custom_call.1} parent=11 // pred_fallthru
          _
        // Predicated region
        $region21: #{tpu_custom_call.1} parent=11 // pred_check
          %p291 = pneg %p125
        $region22: #{tpu_custom_call.1} parent=11 // pred_check_branch
          %293 = sbr.rel (%p291) target = $region24
        $region23: #{tpu_custom_call.1} parent=11 // pred_region
          _
        $region24: #{tpu_custom_call.1} parent=11 // pred_fallthru
          _
        // Predicated region
        $region25: #{tpu_custom_call.1} parent=11 // pred_check
          %p294 = pneg %p146
        $region26: #{tpu_custom_call.1} parent=11 // pred_check_branch
          %296 = sbr.rel (%p294) target = $region28
        $region27: #{tpu_custom_call.1} parent=11 // pred_region
          _
        $region28: #{tpu_custom_call.1} parent=11 // pred_fallthru
          _
        // Predicated region
        $region29: #{tpu_custom_call.1} parent=11 // pred_check
          %p297 = pneg %p167
        $region30: #{tpu_custom_call.1} parent=11 // pred_check_branch
          %299 = sbr.rel (%p297) target = $region32
        $region31: #{tpu_custom_call.1} parent=11 // pred_region
          _
        $region32: #{tpu_custom_call.1} parent=11 // pred_fallthru
          _
        // Predicated region
        $region33: #{tpu_custom_call.1} parent=11 // pred_check
          %p300 = pneg %p188
        $region34: #{tpu_custom_call.1} parent=11 // pred_check_branch
          %302 = sbr.rel (%p300) target = $region36
        $region35: #{tpu_custom_call.1} parent=11 // pred_region
          _
        $region36: #{tpu_custom_call.1} parent=11 // pred_fallthru
          _
        // Predicated region
        $region37: #{tpu_custom_call.1} parent=11 // pred_check
          %p303 = pneg %p214
        $region38: #{tpu_custom_call.1} parent=11 // pred_check_branch
          %305 = sbr.rel (%p303) target = $region40
        $region39: #{tpu_custom_call.1} parent=11 // pred_region
          %p306 = scmp.lt.s32.totalorder %s32, 0
          %s307 = scalar_select %p306, %s32, 0
          %s308 = smul.addr %s307, 2
          %s309 = scalar_lea.vmem %s7, %s308
        $region40: #{tpu_custom_call.1} parent=11 // pred_fallthru
          _
      $region12: #{tpu_custom_call.1} parent=5 // pred_fallthru
        _
      %p310 = scmp.lt.s32.totalorder %s22, 2
      // Predicated region
      $region41: #{tpu_custom_call.1} parent=5 // pred_check
        %p311 = pneg %p310
      $region42: #{tpu_custom_call.1} parent=5 // pred_check_branch
        %313 = sbr.rel (%p311) target = $region44
      $region43: #{tpu_custom_call.1} parent=5 // pred_region
        // Predicated region
        $region45: #{tpu_custom_call.1} parent=43 // pred_check
          %p314 = pneg %p56
        $region46: #{tpu_custom_call.1} parent=43 // pred_check_branch
          %316 = sbr.rel (%p314) target = $region48
        $region47: #{tpu_custom_call.1} parent=43 // pred_region
          %p317 = scmp.lt.s32.totalorder %s29, 1
          %s318 = scalar_select %p317, %s29, 1
          %p319 = scmp.lt.s32.totalorder %s30, 0
          %s320 = scalar_select %p319, %s30, 0
          %s321 = sadd.s32 %s320, %s318
          %s322 = smul.addr %s321, 8
          %s323 = scalar_lea.vmem %s0, %s322
        $region48: #{tpu_custom_call.1} parent=43 // pred_fallthru
          _
      $region44: #{tpu_custom_call.1} parent=5 // pred_fallthru
        _
      %p324 = scmp.le.s32.totalorder 1, %s22
      %p325 = scmp.lt.s32.totalorder %s22, 3
      %p326 = pnand %p324, %p325
      %p327 = pneg %p326
      // Predicated region
      $region49: #{tpu_custom_call.1} parent=5 // pred_check
        _
      $region50: #{tpu_custom_call.1} parent=5 // pred_check_branch
        %329 = sbr.rel (%p326) target = $region52
      $region51: #{tpu_custom_call.1} parent=5 // pred_region
        %s330 = ssub.s32 %s22, 1
        %p331 = scmp.lt.s32.totalorder %s31, 1
        %s332 = scalar_select %p331, %s31, 1
        %p333 = scmp.lt.s32.totalorder %s32, 0
        %s334 = scalar_select %p333, %s32, 0
        %s335 = sadd.s32 %s334, %s332
        %s336 = smul.addr %s335, 8
        %s337 = scalar_lea.vmem %s0, %s336
        %p338 = pneg %p62
        %p339 = pneg %p59
        %p340 = pneg %p83
        %p341 = pneg %p80
        %p342 = pneg %p104
        %p343 = pneg %p101
        %p344 = pneg %p125
        %p345 = pneg %p122
        %p346 = pneg %p146
        %p347 = pneg %p143
        %p348 = pneg %p167
        %p349 = pneg %p164
        %p350 = pneg %p188
        %p351 = pneg %p185
        %p352 = scmp.lt.s32.totalorder %s32, 0
        %s353 = scalar_select %p352, %s32, 0
        %s354 = smul.addr %s353, 2
        %s355 = scalar_lea.vmem %s7, %s354
        %p356 = pneg %p214
        %p357 = pneg %p211
        %p358 = pneg %p242
        %p359 = pneg %p239
        %s360 = sand.u32 %s229, 1
        %s361 = scalar_lea.sflag [#allocation3], %s360
        %s362 = sand.u32 %s229, 1
        %s363 = smul.addr %s362, 24
        %s364 = scalar_lea.vmem [#allocation2], %s363
        %p365 = pneg %p270
        %p366 = pneg %p267
        %s367 = sand.u32 %s257, 1
        %s368 = scalar_lea.sflag [#allocation5], %s367
        %s369 = sand.u32 %s257, 1
        %s370 = smul.addr %s369, 24
        %s371 = scalar_lea.vmem [#allocation4], %s370
        %p372 = scmp.lt.s32.totalorder %s31, 1
        %s373 = scalar_select %p372, %s31, 1
        %p374 = scmp.lt.s32.totalorder %s32, 0
        %s375 = scalar_select %p374, %s32, 0
        %s376 = sadd.s32 %s375, %s373
        %s377 = smul.addr %s376, 8
        %s378 = scalar_lea.vmem %s0, %s377
        %p379 = scmp.lt.s32.totalorder %s32, 0
        %s380 = scalar_select %p379, %s32, 0
        %s381 = smul.addr %s380, 2
        %s382 = scalar_lea.vmem %s7, %s381
        %v383 = vld [vmem:[%s1] sm:$0xff]
        %v384 = vld [vmem:[%s1 + $0x8] sm:$0xff]
        %v385 = vld [vmem:[%s1 + $0x10] sm:$0xff]
        %v386 = vld [vmem:[%s378] sm:$0xff]
        %v387 = vld [vmem:[%s2] sm:$0xff]
        %v388 = vld [vmem:[%s2 + $0x8] sm:$0xff]
        %v389 = vld [vmem:[%s2 + $0x10] sm:$0xff]
        %391 = vset.pattern.permute.xlu0 0
        %392 = vperm.xlu0 %391, %v387
        %v393 = vpop.permute.xlu0 %392
        %396 = vset.pattern.permute.xlu0 0
        %397 = vperm.xlu0 %396, %v388
        %v398 = vpop.permute.xlu0 %397
        %401 = vset.pattern.permute.xlu0 0
        %402 = vperm.xlu0 %401, %v389
        %v403 = vpop.permute.xlu0 %402
        %vm405 = vcmask 64512
        %v407 = vsel %vm405, %v383, 0
        %v410 = vsel %vm405, %v384, 0
        %v413 = vsel %vm405, %v385, 0
        %415 = vmatpush.msra.mxu0 0.0
        %416 = vmatpush.msra.mxu0 0.0
        %417 = vmatpush.msra.mxu0 0.0
        %418 = vmatpush.msra.mxu0 0.0
        %419 = vmatpush.msra.mxu0 0.0
        %420 = vmatpush.msra.mxu0 0.0
        %421 = vmatpush.msra.mxu0 0.0
        %422 = vmatpush.msra.mxu0 0.0
        %423 = vmatpush.msra.mxu0 0.0
        %424 = vmatpush.msra.mxu0 0.0
        %425 = vmatpush.msra.mxu0 0.0
        %426 = vmatpush.msra.mxu0 0.0
        %427 = vmatpush.msra.mxu0 0.0
        %428 = vmatpush.msra.mxu0 0.0
        %429 = vmatpush.msra.mxu0 0.0
        %430 = vmatpush.msra.mxu0 %v386
        %431 = vmatmul.f32.gmra.mxu0 %v407
        %v432 = vpop.f32.mrf.mxu0
        %v433 = vadd.f32 %v393, %v432
        %434 = vmatmul.f32.gmra.mxu0 %v410
        %v435 = vpop.f32.mrf.mxu0
        %v436 = vadd.f32 %v398, %v435
        %437 = vmatmul.f32.gmra.mxu0 %v413
        %v438 = vpop.f32.mrf.mxu0
        %v439 = vadd.f32 %v403, %v438
        %440 = vdwg.mxu0
        %v441 = vxor.u32 %v433, 2147483648
        %v442 = vxor.u32 %v436, 2147483648
        %v443 = vxor.u32 %v439, 2147483648
        %v444 = vmul.f32 %v441, 1.442695
        %v445 = vpow.pop %v444
        %v446 = vmul.f32 %v442, 1.442695
        %v447 = vpow.pop %v446
        %v448 = vmul.f32 %v443, 1.442695
        %v449 = vpow.pop %v448
        %v450 = vadd.f32 %v445, 1.0
        %v451 = vadd.f32 %v447, 1.0
        %v452 = vadd.f32 %v449, 1.0
        %v453 = vrcp.pop %v450
        %v454 = vmul.f32 %v450, %v453
        %v455 = vsub.f32 1.0, %v454
        %v456 = vmul.f32 %v453, %v455
        %v457 = vadd.f32 %v453, %v456
        %vm458 = vweird.f32 %v450
        %vm459 = vweird.f32 %v453
        %vm460 = vmor %vm458, %vm459
        %v461 = vsel %vm460, %v453, %v457
        %v462 = vand.u32 2147483647, %v450
        %vm463 = vcmp.eq.f32.partialorder %v462, 8.507059e+37
        %v464 = vand.u32 %v450, 2147483648
        %v465 = vor.u32 1.1754944e-38, %v464
        %v466 = vsel %vm463, %v465, %v461
        %v467 = vmul.f32 1.0, %v466
        %v468 = vrcp.pop %v451
        %v469 = vmul.f32 %v451, %v468
        %v470 = vsub.f32 1.0, %v469
        %v471 = vmul.f32 %v468, %v470
        %v472 = vadd.f32 %v468, %v471
        %vm473 = vweird.f32 %v451
        %vm474 = vweird.f32 %v468
        %vm475 = vmor %vm473, %vm474
        %v476 = vsel %vm475, %v468, %v472
        %v477 = vand.u32 2147483647, %v451
        %vm478 = vcmp.eq.f32.partialorder %v477, 8.507059e+37
        %v479 = vand.u32 %v451, 2147483648
        %v480 = vor.u32 1.1754944e-38, %v479
        %v481 = vsel %vm478, %v480, %v476
        %v482 = vmul.f32 1.0, %v481
        %v483 = vrcp.pop %v452
        %v484 = vmul.f32 %v452, %v483
        %v485 = vsub.f32 1.0, %v484
        %v486 = vmul.f32 %v483, %v485
        %v487 = vadd.f32 %v483, %v486
        %vm488 = vweird.f32 %v452
        %vm489 = vweird.f32 %v483
        %vm490 = vmor %vm488, %vm489
        %v491 = vsel %vm490, %v483, %v487
        %v492 = vand.u32 2147483647, %v452
        %vm493 = vcmp.eq.f32.partialorder %v492, 8.507059e+37
        %v494 = vand.u32 %v452, 2147483648
        %v495 = vor.u32 1.1754944e-38, %v494
        %v496 = vsel %vm493, %v495, %v491
        %v497 = vmul.f32 1.0, %v496
        %v498 = vld [vmem:[%s382] sm:$0x1]
        %v499 = vld [vmem:[%s382 + $0x1] sm:$0x1]
        %v500 = vld [vmem:[%s3] sm:$0xff]
        %v501 = vld [vmem:[%s3 + $0x8] sm:$0xff]
        %v502 = vld [vmem:[%s3 + $0x10] sm:$0xff]
        %504 = vset.pattern.permute.xlu0 0
        %505 = vperm.xlu0 %504, %v500
        %v506 = vpop.permute.xlu0 %505
        %509 = vset.pattern.permute.xlu0 0
        %510 = vperm.xlu0 %509, %v501
        %v511 = vpop.permute.xlu0 %510
        %514 = vset.pattern.permute.xlu0 0
        %515 = vperm.xlu0 %514, %v502
        %v516 = vpop.permute.xlu0 %515
        %v518 = vmul.f32 %v467, %v506
        %v519 = vmul.f32 %v482, %v511
        %v520 = vmul.f32 %v497, %v516
        %v521 = vmul.f32 %v467, %v467
        %v522 = vmul.f32 %v482, %v482
        %v523 = vmul.f32 %v497, %v497
        %v524 = vld [vmem:[%s4] sm:$0xff]
        %v525 = vld [vmem:[%s4 + $0x8] sm:$0xff]
        %v526 = vld [vmem:[%s4 + $0x10] sm:$0xff]
        %528 = vset.pattern.permute.xlu0 0
        %529 = vperm.xlu0 %528, %v524
        %v530 = vpop.permute.xlu0 %529
        %533 = vset.pattern.permute.xlu0 0
        %534 = vperm.xlu0 %533, %v525
        %v535 = vpop.permute.xlu0 %534
        %538 = vset.pattern.permute.xlu0 0
        %539 = vperm.xlu0 %538, %v526
        %v540 = vpop.permute.xlu0 %539
        %v542 = vmul.f32 %v521, %v530
        %v543 = vmul.f32 %v522, %v535
        %v544 = vmul.f32 %v523, %v540
        %v545 = vadd.f32 %v518, %v542
        %v546 = vadd.f32 %v519, %v543
        %v547 = vadd.f32 %v520, %v544
        %v548 = vld [vmem:[%s5] sm:$0xff]
        %v549 = vld [vmem:[%s5 + $0x8] sm:$0xff]
        %v550 = vld [vmem:[%s5 + $0x10] sm:$0xff]
        %552 = vset.pattern.permute.xlu0 0
        %553 = vperm.xlu0 %552, %v548
        %v554 = vpop.permute.xlu0 %553
        %557 = vset.pattern.permute.xlu0 0
        %558 = vperm.xlu0 %557, %v549
        %v559 = vpop.permute.xlu0 %558
        %562 = vset.pattern.permute.xlu0 0
        %563 = vperm.xlu0 %562, %v550
        %v564 = vpop.permute.xlu0 %563
        %v566 = vperm.slane %v498, 0
        %v567 = vmul.f32 %v554, %v566
        %v568 = vmul.f32 %v559, %v566
        %v569 = vmul.f32 %v564, %v566
        %v570 = vadd.f32 %v545, %v567
        %v571 = vadd.f32 %v546, %v568
        %v572 = vadd.f32 %v547, %v569
        %v573 = vld [vmem:[%s6] sm:$0xff]
        %v574 = vld [vmem:[%s6 + $0x8] sm:$0xff]
        %v575 = vld [vmem:[%s6 + $0x10] sm:$0xff]
        %577 = vset.pattern.permute.xlu0 0
        %578 = vperm.xlu0 %577, %v573
        %v579 = vpop.permute.xlu0 %578
        %582 = vset.pattern.permute.xlu0 0
        %583 = vperm.xlu0 %582, %v574
        %v584 = vpop.permute.xlu0 %583
        %587 = vset.pattern.permute.xlu0 0
        %588 = vperm.xlu0 %587, %v575
        %v589 = vpop.permute.xlu0 %588
        %v591 = vperm.slane %v499, 0
        %v592 = vmul.f32 %v579, %v591
        %v593 = vmul.f32 %v584, %v591
        %v594 = vmul.f32 %v589, %v591
        %v595 = vadd.f32 %v570, %v592
        %v596 = vadd.f32 %v571, %v593
        %v597 = vadd.f32 %v572, %v594
        %598 = vst [vmem:[%s364] sm:$0xff] %v433
        %599 = vst [vmem:[%s364 + $0x8] sm:$0xff] %v436
        %600 = vst [vmem:[%s364 + $0x10] sm:$0xff] %v439
        %601 = vst [vmem:[%s371] sm:$0xff] %v595
        %602 = vst [vmem:[%s371 + $0x8] sm:$0xff] %v596
        %603 = vst [vmem:[%s371 + $0x10] sm:$0xff] %v597
        %s604 = sand.u32 %s229, 1
        %s605 = scalar_lea.sflag [#allocation3], %s604
        %s606 = sand.u32 %s229, 1
        %s607 = smul.addr %s606, 24
        %s608 = scalar_lea.vmem [#allocation2], %s607
        %s609 = sand.u32 %s257, 1
        %s610 = scalar_lea.sflag [#allocation5], %s609
        %s611 = sand.u32 %s257, 1
        %s612 = smul.addr %s611, 24
        %s613 = scalar_lea.vmem [#allocation4], %s612
        // Predicated region
        $region53: #{tpu_custom_call.1} parent=51 // pred_check
          %p614 = pneg %p239
        $region54: #{tpu_custom_call.1} parent=51 // pred_check_branch
          %616 = sbr.rel (%p614) target = $region56
        $region55: #{tpu_custom_call.1} parent=51 // pred_region
          %618 = vsyncadd %s605, 0
          %s619 = smul.addr %s31, 3
          %s620 = sadd.s32 %s32, %s619
          %s621 = smul.addr %s620, 8
          %s622 = scalar_lea.hbm %s8, %s621
          %s623 = sshll.u32 %s608, 4
          %s624 = int_to_ptr.vmem [resolvable:$true] %s623
          %s625 = sshll.u32 %s622, 4
          %s626 = int_to_ptr.hbm [resolvable:$true] %s625
          %631 = dma.vmem_to_hbm [thread:$0]  %s624, 384, %s626, %s605, 128, 128, 8
        $region56: #{tpu_custom_call.1} parent=51 // pred_fallthru
          _
        // Predicated region
        $region57: #{tpu_custom_call.1} parent=51 // pred_check
          %p632 = pneg %p267
        $region58: #{tpu_custom_call.1} parent=51 // pred_check_branch
          %634 = sbr.rel (%p632) target = $region60
        $region59: #{tpu_custom_call.1} parent=51 // pred_region
          %636 = vsyncadd %s610, 0
          %s637 = smul.addr %s31, 3
          %s638 = sadd.s32 %s32, %s637
          %s639 = smul.addr %s638, 8
          %s640 = scalar_lea.hbm %s9, %s639
          %s641 = sshll.u32 %s613, 4
          %s642 = int_to_ptr.vmem [resolvable:$true] %s641
          %s643 = sshll.u32 %s640, 4
          %s644 = int_to_ptr.hbm [resolvable:$true] %s643
          %649 = dma.vmem_to_hbm [thread:$0]  %s642, 384, %s644, %s610, 128, 128, 8
        $region60: #{tpu_custom_call.1} parent=51 // pred_fallthru
          _
      $region52: #{tpu_custom_call.1} parent=5 // pred_fallthru
        _
      %p650 = scmp.le.s32.totalorder 2, %s22
      // Predicated region
      $region61: #{tpu_custom_call.1} parent=5 // pred_check
        %p651 = pneg %p650
      $region62: #{tpu_custom_call.1} parent=5 // pred_check_branch
        %653 = sbr.rel (%p651) target = $region64
      $region63: #{tpu_custom_call.1} parent=5 // pred_region
        %s654 = ssub.s32 %s22, 2
        // Predicated region
        $region65: #{tpu_custom_call.1} parent=63 // pred_check
          %p655 = pneg %p245
        $region66: #{tpu_custom_call.1} parent=63 // pred_check_branch
          %657 = sbr.rel (%p655) target = $region68
        $region67: #{tpu_custom_call.1} parent=63 // pred_region
          %s658 = sand.u32 %s230, 1
          %s659 = scalar_lea.sflag [#allocation3], %s658
          %s660 = sand.u32 %s230, 1
          %s661 = smul.addr %s660, 24
          %s662 = scalar_lea.vmem [#allocation2], %s661
          %664 = dma.done %s659, 384
        $region68: #{tpu_custom_call.1} parent=63 // pred_fallthru
          _
        // Predicated region
        $region69: #{tpu_custom_call.1} parent=63 // pred_check
          %p665 = pneg %p273
        $region70: #{tpu_custom_call.1} parent=63 // pred_check_branch
          %667 = sbr.rel (%p665) target = $region72
        $region71: #{tpu_custom_call.1} parent=63 // pred_region
          %s668 = sand.u32 %s258, 1
          %s669 = scalar_lea.sflag [#allocation5], %s668
          %s670 = sand.u32 %s258, 1
          %s671 = smul.addr %s670, 24
          %s672 = scalar_lea.vmem [#allocation4], %s671
          %674 = dma.done %s669, 384
        $region72: #{tpu_custom_call.1} parent=63 // pred_fallthru
          _
      $region64: #{tpu_custom_call.1} parent=5 // pred_fallthru
        _
    $region6: #{tpu_custom_call.1} parent=1 // loop_footer
      %s26 = sadd.s32 1, %s22
    $region7: #{tpu_custom_call.1} parent=1 // loop_footer_branch
      %21 = sbr.rel target = $region3
    $region8: #{tpu_custom_call.1} parent=1 // loop_exit
      _
    %675 = vsyncpa [#allocation3], 1
    %s676 = scalar_lea.sflag [#allocation3], 1
    %677 = vsyncpa %s676, 1
    %678 = vsyncpa [#allocation5], 1
    %s679 = scalar_lea.sflag [#allocation5], 1
    %680 = vsyncpa %s679, 1

</llo_original>
